<compile_context>
chip_gen: v7x
topology: tpu7x:2x2x1
jax: 0.10.0
libtpu: 0.0.40
codegen_flags: <defaults>
</compile_context>

<pallas_src>
import functools

import jax
import jax.numpy as jnp
from jax import lax
from jax.experimental import pallas as pl
from jax.experimental.pallas import tpu as pltpu


def _round_up(x, m):
    return (x + m - 1) // m * m


def _cdiv(a, b):
    return -(-a // b)


def _tpu_hw_info():
    """(vmem_capacity_bytes, tensorcores_per_chip) with safe fallbacks."""
    vmem_cap = 64 * 1024 * 1024          # conservative: v7x per-TC VMEM
    cores = 1
    try:
        info = pltpu.get_tpu_info()
        vmem_cap = int(info.vmem_capacity_bytes)
    except Exception:
        pass
    try:
        kind = jax.devices()[0].device_kind.lower()
        if any(tag in kind for tag in ("v4", "v5p", "v7", "7x")):
            cores = 2                    # megacore / dual-TensorCore chips
    except Exception:
        pass
    return vmem_cap, cores


def _ce_sum_kernel(preds_ref, labels_ref, out_ref, *, n_valid, scale, tile_n):
    """Accumulate sum_i(-log_softmax(preds)[i, labels[i]]) for this partition.

    preds_ref  : VMEM (tile_n, C) float
    labels_ref : VMEM (tile_n, 1) int32
    out_ref    : SMEM (1, 1) float32 -- resident accumulator for this partition
    """
    step = pl.program_id(1)

    @pl.when(step == 0)
    def _():
        out_ref[0, 0] = jnp.float32(0.0)

    logits = preds_ref[...].astype(jnp.float32)          # (tile_n, C)
    labels = labels_ref[...]                             # (tile_n, 1) int32
    tn, c = logits.shape

    # numerically-stable log-softmax; the label logit is picked from the
    # shifted values with a compare+select (no one-hot matmul, no '+ row_max').
    row_max = jnp.max(logits, axis=-1, keepdims=True)    # (tile_n, 1)
    shifted = logits - row_max
    lse = jnp.log(jnp.sum(jnp.exp(shifted), axis=-1, keepdims=True))
    cls_idx = lax.broadcasted_iota(jnp.int32, (1, c), 1)  # single lane-iota vreg
    # NOTE: out-of-range labels (<0 or >=C) silently pick 0.0 here instead of
    # raising like torch.nn.CrossEntropyLoss.
    picked = jnp.sum(jnp.where(cls_idx == labels, shifted, 0.0),
                     axis=-1, keepdims=True)             # (tile_n, 1)
    nll = lse - picked                                   # (tile_n, 1)

    # Mask padding / overhang / re-read rows (global row index >= true N).
    row0 = (pl.program_id(0) * pl.num_programs(1) + step) * tile_n
    row_idx = row0 + lax.broadcasted_iota(jnp.int32, (tn, 1), 0)
    nll = jnp.where(row_idx < n_valid, nll, 0.0)

    out_ref[0, 0] += jnp.sum(nll)

    # fused finalize: each partition carries sigma_ce / N, the wrapper only
    # sums the partitions.
    @pl.when(step == pl.num_programs(1) - 1)
    def _():
        out_ref[0, 0] = out_ref[0, 0] * jnp.float32(scale)


def cross_entropy_mean(preds, labels, *, sigma_ce=1.0, max_tile_n=None):
    """sigma_ce * mean_i(-log_softmax(preds)[i, labels[i]]) as an f32 scalar.

    preds: (N, C) float (f32 or bf16), labels: (N,) int.
    """
    n, c = preds.shape
    labels2d = labels.reshape(n, 1).astype(jnp.int32)

    itemsize = jnp.dtype(preds.dtype).itemsize
    lane_c = _round_up(max(c, 1), 128)   # lanes actually occupied in VMEM

    vmem_cap, n_cores = _tpu_hw_info()

    # Per-row VMEM footprint:
    #   double-buffered preds block (lane padded)
    # + double-buffered labels block (lane padded to 128 int32 lanes)
    # + ~3 full-tile f32 temps (shifted / exp / select) inside the body.
    n_buffers = 2
    vmem_per_row = n_buffers * (lane_c * itemsize + 128 * 4) + 3 * lane_c * 4

    vmem_budget = max(8 << 20, int(0.7 * vmem_cap) - (4 << 20))
    rows_by_vmem = max(8, vmem_budget // vmem_per_row)
    # Cap the real HBM bytes per preds tile at ~16 MiB.
    rows_by_hbm = max(8, (16 << 20) // max(1, c * itemsize))

    tile_n = min(rows_by_vmem, rows_by_hbm, _round_up(n, 8))
    if max_tile_n is not None:
        tile_n = min(tile_n, int(max_tile_n))
    tile_n = max(8, (tile_n // 8) * 8)

    n_tiles = _cdiv(n, tile_n)
    num_parts = 2 if (n_cores >= 2 and n_tiles >= 2) else 1
    tiles_per_part = _cdiv(n_tiles, num_parts)
    last_block = n_tiles - 1

    def row_block_map(p, i):
        # Clamp so logical padding tiles (from the partition round-up) re-read
        # the last real tile instead of DMA-ing out of bounds; those rows are
        # masked to zero inside the kernel.
        return (jnp.minimum(p * tiles_per_part + i, last_block), 0)

    kernel = functools.partial(
        _ce_sum_kernel,
        n_valid=n,
        scale=float(sigma_ce) / float(n),
        tile_n=tile_n,
    )

    vmem_needed = tile_n * vmem_per_row + (8 << 20)
    vmem_limit = int(min(int(0.92 * vmem_cap), max(32 << 20, vmem_needed)))

    partials = pl.pallas_call(
        kernel,
        out_shape=jax.ShapeDtypeStruct((num_parts, 1), jnp.float32),
        grid_spec=pltpu.PrefetchScalarGridSpec(
            num_scalar_prefetch=0,
            grid=(num_parts, tiles_per_part),
            in_specs=[
                pl.BlockSpec((tile_n, c), row_block_map),
                pl.BlockSpec((tile_n, 1), row_block_map),
            ],
            out_specs=pl.BlockSpec((1, 1), lambda p, i: (p, 0),
                                   memory_space=pltpu.SMEM),
        ),
        compiler_params=pltpu.CompilerParams(
            dimension_semantics=("parallel", "arbitrary"),
            vmem_limit_bytes=vmem_limit,
        ),
        cost_estimate=pl.CostEstimate(
            flops=int(5 * n * c),
            transcendentals=int(n * c + n),
            bytes_accessed=int(n * c * itemsize + n * 4 + num_parts * 4),
        ),
    )(preds, labels2d)

    return jnp.sum(partials)


class HCLLossPallas:
    """JAX/Pallas re-implementation of HCLLoss.forward."""

    def __init__(self, args, contrast_mode="all", base_temperature=0.07):
        self.temperature = args["temp"]
        self.contrast_mode = contrast_mode
        self.base_temperature = base_temperature
        self.sigma_global = args["sigma_global"]
        self.sigma_temp = args["sigma_temp"]
        self.sigma_spa = args["sigma_spa"]
        self.sigma_ce = args["sigma_ce"]
        self.sigma_temp_cycle = args["sigma_temp_cycle"]
        self.sigma_spa_cycle = args["sigma_spa_cycle"]

    def __call__(self, contrasts, preds, labels):
        labels = labels.reshape(-1)
        # sigma_ce scaling is fused into the kernel finalize.
        ce_loss = cross_entropy_mean(preds, labels, sigma_ce=self.sigma_ce)

        contrasts = dict(contrasts)  # mimic the in-place dict update
        contrasts["global"] = self.sigma_global * contrasts["global"]
        contrasts["temp"] = self.sigma_temp * contrasts["temp"]
        contrasts["temp_cycle"] = self.sigma_temp_cycle * contrasts["temp_cycle"]
        contrasts["spatial"] = self.sigma_spa * contrasts["spatial"]
        contrasts["spa_cycle"] = self.sigma_spa_cycle * contrasts["spa_cycle"]

        contrast_loss = (
            contrasts["global"]
            + contrasts["temp"]
            + contrasts["spatial"]
            + contrasts["temp_cycle"]
            + contrasts["spa_cycle"]
        )
        loss = ce_loss + contrast_loss
        return loss, ce_loss, contrasts


if __name__ == "__main__":
    key = jax.random.PRNGKey(0)
    k_preds, k_labels, k_contrast, k_p2, k_l2 = jax.random.split(key, 5)

    # --- small demo shapes matching the module's forward ---
    N, C = 8, 16
    preds = jax.random.normal(k_preds, (N, C), dtype=jnp.float32)
    labels = jax.random.randint(k_labels, (N,), 0, C, dtype=jnp.int32)

    cvals = jax.random.uniform(k_contrast, (5,), dtype=jnp.float32)
    contrasts = {
        "global": cvals[0],
        "temp": cvals[1],
        "temp_cycle": cvals[2],
        "spatial": cvals[3],
        "spa_cycle": cvals[4],
    }

    args = {
        "temp": 0.07,
        "sigma_global": 1.0,
        "sigma_temp": 0.5,
        "sigma_spa": 0.5,
        "sigma_ce": 1.0,
        "sigma_temp_cycle": 0.25,
        "sigma_spa_cycle": 0.25,
    }

    hcl = HCLLossPallas(args)
    loss, ce_loss, scaled_contrasts = hcl(contrasts, preds, labels)
    jax.block_until_ready(loss)
    jax.block_until_ready(ce_loss)

    # sanity check against pure-JAX reference cross entropy
    logp = jax.nn.log_softmax(preds, axis=-1)
    ref_ce = args["sigma_ce"] * (-logp[jnp.arange(N), labels]).mean()
    assert jnp.allclose(ce_loss, ref_ce, atol=1e-5, rtol=1e-5), (ce_loss, ref_ce)

    ref_contrast = (
        args["sigma_global"] * cvals[0]
        + args["sigma_temp"] * cvals[1]
        + args["sigma_spa"] * cvals[3]
        + args["sigma_temp_cycle"] * cvals[2]
        + args["sigma_spa_cycle"] * cvals[4]
    )
    assert jnp.allclose(loss, ref_ce + ref_contrast, atol=1e-5, rtol=1e-5)

    # --- second check: exercise multi-tile grid, optional 2-way partition,
    # and an overhanging (partial) last block with in-kernel row masking,
    # with NO wrapper-side padding of preds (small shapes, forced tiny tile).
    N2, C2 = 43, 16
    preds2 = jax.random.normal(k_p2, (N2, C2), dtype=jnp.float32)
    labels2 = jax.random.randint(k_l2, (N2,), 0, C2, dtype=jnp.int32)
    ce2 = cross_entropy_mean(preds2, labels2, sigma_ce=0.7, max_tile_n=8)
    jax.block_until_ready(ce2)
    logp2 = jax.nn.log_softmax(preds2, axis=-1)
    ref2 = 0.7 * (-logp2[jnp.arange(N2), labels2]).mean()
    assert jnp.allclose(ce2, ref2, atol=1e-5, rtol=1e-5), (ce2, ref2)

    print("KERNEL_OK")
</pallas_src>

<mosaic_0001>
module attributes {stable_mosaic.version = 11 : i64} {
  func.func @_ce_sum_kernel(%arg0: i32, %arg1: i32, %arg2: memref<8x16xf32, #tpu.memory_space<vmem>>, %arg3: memref<8x1xi32, #tpu.memory_space<vmem>>, %arg4: memref<1x1xf32, #tpu.memory_space<smem>>) attributes {dimension_semantics = [#tpu.dimension_semantics<parallel>, #tpu.dimension_semantics<arbitrary>], iteration_bounds = array<i64: 1, 1>, scalar_prefetch = 0 : i64, scratch_operands = 0 : i64, tpu.core_type = #tpu.core_type<tc>, window_params = [{transform_indices = @transform_0, window_bounds = array<i64: 8, 16>}, {transform_indices = @transform_1, window_bounds = array<i64: 8, 1>}, {transform_indices = @transform_2, window_bounds = array<i64: 1, 1>}]} {
    %c0_i32 = arith.constant 0 : i32
    %0 = arith.cmpi eq, %arg1, %c0_i32 : i32
    %1 = arith.extui %0 : i1 to i32
    %c0_i32_0 = arith.constant 0 : i32
    %2 = arith.cmpi ne, %1, %c0_i32_0 : i32
    scf.if %2 {
      %cst_16 = arith.constant 0.000000e+00 : f32
      %c0_17 = arith.constant 0 : index
      %c0_18 = arith.constant 0 : index
      %42 = memref.load %arg4[%c0_17, %c0_18] : memref<1x1xf32, #tpu.memory_space<smem>>
      memref.store %cst_16, %arg4[%c0_17, %c0_18] : memref<1x1xf32, #tpu.memory_space<smem>>
    } else {
    }
    %c0 = arith.constant 0 : index
    %c0_1 = arith.constant 0 : index
    %3 = vector.load %arg2[%c0, %c0_1] : memref<8x16xf32, #tpu.memory_space<vmem>>, vector<8x16xf32>
    %c0_2 = arith.constant 0 : index
    %c0_3 = arith.constant 0 : index
    %4 = vector.load %arg3[%c0_2, %c0_3] : memref<8x1xi32, #tpu.memory_space<vmem>>, vector<8x1xi32>
    %cst = arith.constant dense<0xFF800000> : vector<8xf32>
    %5 = vector.multi_reduction <maximumf>, %3, %cst [1] : vector<8x16xf32> to vector<8xf32>
    %6 = vector.shape_cast %5 : vector<8xf32> to vector<8x1xf32>
    %7 = vector.broadcast %6 : vector<8x1xf32> to vector<8x16xf32>
    %8 = arith.subf %3, %7 : vector<8x16xf32>
    %9 = math.exp %8 : vector<8x16xf32>
    %cst_4 = arith.constant dense<0.000000e+00> : vector<8xf32>
    %10 = vector.multi_reduction <add>, %9, %cst_4 [1] : vector<8x16xf32> to vector<8xf32>
    %11 = vector.shape_cast %10 : vector<8xf32> to vector<8x1xf32>
    %12 = math.log %11 : vector<8x1xf32>
    %13 = tpu.iota {dimensions = array<i32: 1>} : vector<1x16xi32>
    %14 = vector.broadcast %13 : vector<1x16xi32> to vector<8x16xi32>
    %15 = vector.broadcast %4 : vector<8x1xi32> to vector<8x16xi32>
    %16 = arith.cmpi eq, %14, %15 : vector<8x16xi32>
    %cst_5 = arith.constant 0.000000e+00 : f32
    %17 = vector.broadcast %cst_5 : f32 to vector<8x16xf32>
    %18 = arith.select %16, %8, %17 : vector<8x16xi1>, vector<8x16xf32>
    %cst_6 = arith.constant dense<0.000000e+00> : vector<8xf32>
    %19 = vector.multi_reduction <add>, %18, %cst_6 [1] : vector<8x16xf32> to vector<8xf32>
    %20 = vector.shape_cast %19 : vector<8xf32> to vector<8x1xf32>
    %21 = arith.subf %12, %20 : vector<8x1xf32>
    %c1_i32 = arith.constant 1 : i32
    %22 = arith.muli %arg0, %c1_i32 : i32
    %23 = arith.addi %22, %arg1 : i32
    %c8_i32 = arith.constant 8 : i32
    %24 = arith.muli %23, %c8_i32 : i32
    %25 = tpu.iota {dimensions = array<i32: 0>} : vector<8x1xi32>
    %26 = vector.broadcast %24 : i32 to vector<8x1xi32>
    %27 = arith.addi %26, %25 : vector<8x1xi32>
    %c8_i32_7 = arith.constant 8 : i32
    %28 = vector.broadcast %c8_i32_7 : i32 to vector<8x1xi32>
    %29 = arith.cmpi slt, %27, %28 : vector<8x1xi32>
    %cst_8 = arith.constant 0.000000e+00 : f32
    %30 = vector.broadcast %cst_8 : f32 to vector<8x1xf32>
    %31 = arith.select %29, %21, %30 : vector<8x1xi1>, vector<8x1xf32>
    %c0_9 = arith.constant 0 : index
    %c0_10 = arith.constant 0 : index
    %32 = memref.load %arg4[%c0_9, %c0_10] : memref<1x1xf32, #tpu.memory_space<smem>>
    %33 = vector.shape_cast %31 : vector<8x1xf32> to vector<1x8x1xf32>
    %cst_11 = arith.constant dense<0.000000e+00> : vector<1xf32>
    %34 = vector.multi_reduction <add>, %33, %cst_11 [1, 2] : vector<1x8x1xf32> to vector<1xf32>
    %35 = vector.shape_cast %34 : vector<1xf32> to vector<1x1x1xf32>
    %36 = vector.extract %35[0, 0, 0] : f32 from vector<1x1x1xf32>
    %37 = arith.addf %32, %36 : f32
    %c0_12 = arith.constant 0 : index
    %c0_13 = arith.constant 0 : index
    %38 = memref.load %arg4[%c0_12, %c0_13] : memref<1x1xf32, #tpu.memory_space<smem>>
    memref.store %37, %arg4[%c0_12, %c0_13] : memref<1x1xf32, #tpu.memory_space<smem>>
    %c0_i32_14 = arith.constant 0 : i32
    %39 = arith.cmpi eq, %arg1, %c0_i32_14 : i32
    %40 = arith.extui %39 : i1 to i32
    %c0_i32_15 = arith.constant 0 : i32
    %41 = arith.cmpi ne, %40, %c0_i32_15 : i32
    scf.if %41 {
      %c0_16 = arith.constant 0 : index
      %c0_17 = arith.constant 0 : index
      %42 = memref.load %arg4[%c0_16, %c0_17] : memref<1x1xf32, #tpu.memory_space<smem>>
      %cst_18 = arith.constant 1.250000e-01 : f32
      %43 = arith.mulf %42, %cst_18 : f32
      %c0_19 = arith.constant 0 : index
      %c0_20 = arith.constant 0 : index
      %44 = memref.load %arg4[%c0_19, %c0_20] : memref<1x1xf32, #tpu.memory_space<smem>>
      memref.store %43, %arg4[%c0_19, %c0_20] : memref<1x1xf32, #tpu.memory_space<smem>>
    } else {
    }
    return
  }
  func.func @transform_0(%arg0: i32, %arg1: i32) -> (i32, i32) {
    %c1_i32 = arith.constant 1 : i32
    %0 = arith.muli %arg0, %c1_i32 : i32
    %1 = arith.addi %0, %arg1 : i32
    %c0_i32 = arith.constant 0 : i32
    %2 = arith.minsi %1, %c0_i32 : i32
    %c0_i32_0 = arith.constant 0 : i32
    %c0_i32_1 = arith.constant 0 : i32
    return %2, %c0_i32_0 : i32, i32
  }
  func.func @transform_1(%arg0: i32, %arg1: i32) -> (i32, i32) {
    %c1_i32 = arith.constant 1 : i32
    %0 = arith.muli %arg0, %c1_i32 : i32
    %1 = arith.addi %0, %arg1 : i32
    %c0_i32 = arith.constant 0 : i32
    %2 = arith.minsi %1, %c0_i32 : i32
    %c0_i32_0 = arith.constant 0 : i32
    %c0_i32_1 = arith.constant 0 : i32
    return %2, %c0_i32_0 : i32, i32
  }
  func.func @transform_2(%arg0: i32, %arg1: i32) -> (i32, i32) {
    %c0_i32 = arith.constant 0 : i32
    %c0_i32_0 = arith.constant 0 : i32
    return %arg0, %c0_i32 : i32, i32
  }
}

</mosaic_0001>

<llo_original>
// kernel: tpu_custom_call.1
$region0: #{tpu_custom_call.1}
  #allocation0 [shape = 'u32[]', space=smem, size = 0x4, offset = 0x4, fixed_abs, tag = 'smem constant byte address 0x4 - core index']
  #allocation1 [shape = 'u32[144,128]{1,0:T(1,128)}', space=vmem, size = 0x12000, scoped, tag = 'internal scratch']
  %s0 = inlined_call_operand.vmem [shape: f32[8,16], index: 0, kind: input, shape index: {}]
  %s1 = inlined_call_operand.vmem [shape: s32[8,1], index: 1, kind: input, shape index: {}]
  %s2 = inlined_call_operand.hbm [shape: f32[1,1], index: 2, kind: output, shape index: {}]
  %s3 = sld [smem:[#allocation0]]
  $region26: #{tpu_custom_call.1} parent=0
    _
  %s5 = ssub.s32 1, %s3
  %s6 = scalar_select 0, %s5, %s3
  $region1: #{tpu_custom_call.1} parent=0
    #allocation2 [shape = 'u8[512]{0}', space=smem, size = 0x200, scoped, tag = 'output window, operand 0, single buffered']
    #allocation3 [shape = 's32[1]{0}', space=sflag, size = 0x4, scoped, tag = 'scoped memory for tpu_custom_call.1']
    %7 = vsyncpa [#allocation3], 0
    // Predicated region
    $region2: #{tpu_custom_call.1} parent=1 // pred_check
      _
    $region3: #{tpu_custom_call.1} parent=1 // pred_check_branch
      %9 = sbr.rel (0) target = $region5
    $region4: #{tpu_custom_call.1} parent=1 // pred_region
      %s10 = sadd.s32 0, 0
      %p11 = scmp.lt.s32.totalorder %s10, 0
      %s12 = scalar_select %p11, %s10, 0
      %p13 = scmp.lt.s32.totalorder %s12, 0
      %s14 = scalar_select %p13, %s12, 0
      %s15 = smul.addr %s14, 8
      %s16 = scalar_lea.vmem %s0, %s15
      %s17 = sadd.s32 0, 0
      %p18 = scmp.lt.s32.totalorder %s17, 0
      %s19 = scalar_select %p18, %s17, 0
    $region5: #{tpu_custom_call.1} parent=1 // pred_fallthru
      _
    // Predicated region
    $region6: #{tpu_custom_call.1} parent=1 // pred_check
      _
    $region7: #{tpu_custom_call.1} parent=1 // pred_check_branch
      %21 = sbr.rel (0) target = $region9
    $region8: #{tpu_custom_call.1} parent=1 // pred_region
      %s22 = sadd.s32 0, 0
      %p23 = scmp.lt.s32.totalorder %s22, 0
      %s24 = scalar_select %p23, %s22, 0
      %p25 = scmp.lt.s32.totalorder %s24, 0
      %s26 = scalar_select %p25, %s24, 0
      %s27 = smul.addr %s26, 8
      %s28 = scalar_lea.vmem %s1, %s27
      %s29 = sadd.s32 0, 0
      %p30 = scmp.lt.s32.totalorder %s29, 0
      %s31 = scalar_select %p30, %s29, 0
    $region9: #{tpu_custom_call.1} parent=1 // pred_fallthru
      _
    %s32 = sadd.s32 0, 0
    %p33 = scmp.lt.s32.totalorder %s32, 0
    %s34 = scalar_select %p33, %s32, 0
    %p35 = scmp.lt.s32.totalorder %s34, 0
    %s36 = scalar_select %p35, %s34, 0
    %s37 = smul.addr %s36, 8
    %s38 = scalar_lea.vmem %s0, %s37
    %s39 = sadd.s32 0, 0
    %p40 = scmp.lt.s32.totalorder %s39, 0
    %s41 = scalar_select %p40, %s39, 0
    %p42 = scmp.lt.s32.totalorder %s41, 0
    %s43 = scalar_select %p42, %s41, 0
    %s44 = smul.addr %s43, 8
    %s45 = scalar_lea.vmem %s1, %s44
    %s46 = sadd.s32 0, 0
    %p47 = scmp.lt.s32.totalorder %s46, 0
    %s48 = scalar_select %p47, %s46, 0
    %p49 = scmp.lt.s32.totalorder %s48, 0
    %s50 = scalar_select %p49, %s48, 0
    %s51 = smul.addr %s50, 8
    %s52 = scalar_lea.vmem %s0, %s51
    %s53 = sadd.s32 0, 0
    %p54 = scmp.lt.s32.totalorder %s53, 0
    %s55 = scalar_select %p54, %s53, 0
    %s56 = sadd.s32 0, 0
    %p57 = scmp.lt.s32.totalorder %s56, 0
    %s58 = scalar_select %p57, %s56, 0
    %p59 = scmp.lt.s32.totalorder %s58, 0
    %s60 = scalar_select %p59, %s58, 0
    %s61 = smul.addr %s60, 8
    %s62 = scalar_lea.vmem %s1, %s61
    %s63 = sadd.s32 0, 0
    %p64 = scmp.lt.s32.totalorder %s63, 0
    %s65 = scalar_select %p64, %s63, 0
    %p66 = scmp.eq.s32.totalorder 0, 0
    // Predicated region
    $region10: #{tpu_custom_call.1} parent=1 // pred_check
      %p67 = pneg %p66
    $region11: #{tpu_custom_call.1} parent=1 // pred_check_branch
      %69 = sbr.rel (%p67) target = $region13
    $region12: #{tpu_custom_call.1} parent=1 // pred_region
      %s70 = scalar_lea.smem [#allocation2], 0
      %71 = sst [smem:[%s70]] 0.0
    $region13: #{tpu_custom_call.1} parent=1 // pred_fallthru
      _
    %v72 = vld [vmem:[%s52] sm:$0xff]
    %v73 = vld [vmem:[%s62] sm:$0xff]
    %vm74 = vcmask 130048
    %v75 = vsel %vm74, %v72, -inf
    %76 = vmax.xlane.f32.xlu0 %v75
    %v77 = vpop.xlane.xlu0 %76
    %v78 = vsub.f32 %v72, %v77
    %v79 = vmul.f32 %v78, 1.442695
    %v80 = vpow.pop %v79
    %v81 = vsel %vm74, %v80, 0.0
    %82 = vadd.xlane.f32.xlu0 %v81
    %v83 = vpop.xlane.xlu0 %82
    %v84 = vlog2.pop %v83
    %v85 = vmul.f32 %v84, 0.6931472
    %v86 = vlaneseq
    %v87 = vand.u32 %v86, 127
    %88 = vset.pattern.permute.xlu0 0
    %89 = vperm.xlu0 %88, %v73
    %v90 = vpop.permute.xlu0 %89
    %vm91 = vcmp.eq.s32.totalorder %v87, %v90
    %v92 = vsel %vm91, %v78, 0.0
    %v93 = vsel %vm74, %v92, 0.0
    %94 = vadd.xlane.f32.xlu0 %v93
    %v95 = vpop.xlane.xlu0 %94
    %v96 = vsub.f32 %v85, %v95
    %s97 = sadd.s32 0, 0
    %s98 = smul.u32 %s97, 8
    %v99 = vlaneseq
    %v100 = vshrl.u32 %v99, 7
    %v101 = vstv %s98
    %v102 = vadd.s32 %v101, %v100
    %vm103 = vcmp.lt.s32.totalorder %v102, 8
    %v104 = vsel %vm103, %v96, 0.0
    %s105 = sld [smem:[#allocation2]]
    %vm106 = vcmask 7168
    %v107 = vsel %vm106, %v104, 0.0
    %108 = vadd.xlane.f32.xlu0 %v107
    %v109 = vpop.xlane.xlu0 %108
    %v110 = vrot.slane %v109, 4
    %v111 = vadd.f32 %v109, %v110
    %v112 = vrot.slane %v111, 2
    %v113 = vadd.f32 %v111, %v112
    %v114 = vrot.slane %v113, 1
    %v115 = vadd.f32 %v113, %v114
    %s116 = vtos %v115
    %s117 = sadd.f32 %s105, %s116
    %s118 = scalar_lea.smem [#allocation2], 0
    %119 = sst [smem:[%s118]] %s117
    // Predicated region
    $region14: #{tpu_custom_call.1} parent=1 // pred_check
      %p120 = pneg %p66
    $region15: #{tpu_custom_call.1} parent=1 // pred_check_branch
      %122 = sbr.rel (%p120) target = $region17
    $region16: #{tpu_custom_call.1} parent=1 // pred_region
      %s123 = sld [smem:[#allocation2]]
      %s124 = smul.f32 %s123, 0.125
      %125 = sst [smem:[%s118]] %s124
    $region17: #{tpu_custom_call.1} parent=1 // pred_fallthru
      _
    // Predicated region
    $region18: #{tpu_custom_call.1} parent=1 // pred_check
      _
    $region19: #{tpu_custom_call.1} parent=1 // pred_check_branch
      %127 = sbr.rel (0) target = $region21
    $region20: #{tpu_custom_call.1} parent=1 // pred_region
      %s129 = ssub.s32 16, 16
      %130 = vsyncadd [#allocation3], %s129
      %133 = dma.smem_to_hbm [#allocation2], 16, %s2, [#allocation3]
    $region21: #{tpu_custom_call.1} parent=1 // pred_fallthru
      _
    // Predicated region
    $region22: #{tpu_custom_call.1} parent=1 // pred_check
      _
    $region23: #{tpu_custom_call.1} parent=1 // pred_check_branch
      %135 = sbr.rel (0) target = $region25
    $region24: #{tpu_custom_call.1} parent=1 // pred_region
      %136 = dma.done [#allocation3], 16
    $region25: #{tpu_custom_call.1} parent=1 // pred_fallthru
      _
    %137 = sfence
    %138 = vsyncpa [#allocation3], 1

</llo_original>
